<compile_context>
chip_gen: v7x
topology: tpu7x:2x2x1
jax: 0.10.0
libtpu: 0.0.40
codegen_flags: <defaults>
</compile_context>

<pallas_src>
import functools
from math import ceil

import jax
import jax.numpy as jnp
from jax import lax
from jax.experimental import pallas as pl
from jax.experimental.pallas import tpu as pltpu

_LANE = 128


def _round_up(v: int, m: int) -> int:
    return ((v + m - 1) // m) * m


@functools.lru_cache(maxsize=1)
def _max_row_block() -> int:
    """Largest row block (rows of 128 points) we tile with, per chip VMEM size."""
    try:
        vmem = getattr(pltpu.get_tpu_info(), "vmem_capacity_bytes", 64 << 20)
    except Exception:  # pragma: no cover - conservative fallback
        vmem = 64 << 20
    # ~29 MiB double-buffered at 1024 rows / levels=5 / f32: fine on 128 MiB VMEM
    # (v5e/v6e); cap at 512 rows (~15 MiB) on 64 MiB parts (v7x).
    return 1024 if vmem >= (100 << 20) else 512


def _make_sh_kernel(levels: int, tm: int, chunk: int):
    assert 1 <= levels <= 5, "components_from_spherical_harmonics supports 1..5 levels"
    assert tm % chunk == 0
    n_chunks = tm // chunk

    def kernel(x_ref, o_ref):
        # x_ref: (3, tm, 128) in input dtype, o_ref: (levels**2, tm, 128) in out dtype
        odt = o_ref.dtype
        # Hoisted constant channel-0 slab (JAX does not CSE broadcast_in_dim).
        c0 = jnp.full((chunk, _LANE), 0.28209479177387814, dtype=odt)

        def body(c, carry):
            r0 = pl.multiple_of(c * chunk, chunk)
            rows = pl.ds(r0, chunk)

            def st(k, v):
                o_ref[k, rows, :] = v.astype(odt)

            # l = 0
            o_ref[0, rows, :] = c0

            if levels > 1:
                # Upcast in-register; inputs may arrive as bf16.
                x = x_ref[0, rows, :].astype(jnp.float32)
                y = x_ref[1, rows, :].astype(jnp.float32)
                z = x_ref[2, rows, :].astype(jnp.float32)
                st(1, 0.4886025119029199 * y)
                st(2, 0.4886025119029199 * z)
                st(3, 0.4886025119029199 * x)

            # l = 2
            if levels > 2:
                xx = x * x
                yy = y * y
                zz = z * z
                xy = x * y
                yz = y * z
                xz = x * z
                xx_m_yy = xx - yy
                st(4, 1.0925484305920792 * xy)
                st(5, 1.0925484305920792 * yz)
                st(6, 0.9461746957575601 * zz - 0.31539156525251999)
                st(7, 1.0925484305920792 * xz)
                st(8, 0.5462742152960396 * xx_m_yy)

            # l = 3
            if levels > 3:
                three_xx_m_yy = 3.0 * xx - yy
                xx_m_3yy = xx - 3.0 * yy
                five_zz_m_1 = 5.0 * zz - 1.0
                st(9, 0.5900435899266435 * y * three_xx_m_yy)
                st(10, 2.890611442640554 * xy * z)
                st(11, 0.4570457994644658 * y * five_zz_m_1)
                st(12, 0.3731763325901154 * z * (5.0 * zz - 3.0))
                st(13, 0.4570457994644658 * x * five_zz_m_1)
                st(14, 1.445305721320277 * z * xx_m_yy)
                st(15, 0.5900435899266435 * x * xx_m_3yy)

            # l = 4
            if levels > 4:
                seven_zz_m_1 = 7.0 * zz - 1.0
                seven_zz_m_3 = 7.0 * zz - 3.0
                st(16, 2.5033429417967046 * xy * xx_m_yy)
                st(17, 1.7701307697799304 * yz * three_xx_m_yy)
                st(18, 0.9461746957575601 * xy * seven_zz_m_1)
                st(19, 0.6690465435572892 * yz * seven_zz_m_3)
                st(20, 0.10578554691520431 * (35.0 * zz * zz - 30.0 * zz + 3.0))
                st(21, 0.6690465435572892 * xz * seven_zz_m_3)
                st(22, 0.47308734787878004 * xx_m_yy * seven_zz_m_1)
                st(23, 1.7701307697799304 * xz * xx_m_3yy)
                st(24, 0.6258357354491761 * (xx * xx_m_3yy - yy * three_xx_m_yy))

            return carry

        # Partial unroll: keeps slot occupancy without replicating the body tm/chunk
        # times (full unroll at tm=1024 bloats the bundle stream and live ranges).
        lax.fori_loop(0, n_chunks, body, 0, unroll=min(4, n_chunks))

    return kernel


@functools.partial(jax.jit, static_argnames=("levels",))
def spherical_harmonics_layer(x, levels: int, omega: float = 1.0):
    """Pallas implementation of SphericalHarmonicsLayer.forward.

    x: array of shape (..., D) with D >= 3 (only [..., :3] is used).
    Returns array of shape (..., levels**2), dtype = x.dtype.
    `omega` is stored but unused, exactly as in the PyTorch reference.
    """
    del omega  # unused in the reference forward
    assert 1 <= levels <= 5
    l2 = levels ** 2
    batch_shape = x.shape[:-1]
    out_dtype = x.dtype
    itemsize = jnp.dtype(out_dtype).itemsize

    flat = x.reshape(-1, x.shape[-1])
    n = flat.shape[0]

    # Channels-first, lane-dense points.  Transpose first, then pad the minor axis so
    # slice + pad fuse into the transpose's output; keep the input dtype as-is.
    dirs_cf = flat[:, :3].T  # (3, N)

    # Row/block sizing: big blocks amortize the ~0.35us per-grid-step cost; even block
    # count keeps both TensorCores of a dual-TC chip busy; ceil-split minimizes padded
    # writes for small / awkward N.
    row_align = 16 if itemsize < 4 else 8
    tm_max = _max_row_block()
    n_rows = max(1, ceil(n / _LANE))
    n_blocks = max(1, ceil(n_rows / tm_max))
    if n_blocks > 1 and n_blocks % 2:
        n_blocks += 1
    tm = _round_up(ceil(n_rows / n_blocks), row_align)
    n_rows_pad = tm * n_blocks
    n_pad = n_rows_pad * _LANE
    chunk = 16 if tm % 16 == 0 else 8

    dirs_cf = jnp.pad(dirs_cf, ((0, 0), (0, n_pad - n)))
    dirs_t = dirs_cf.reshape(3, n_rows_pad, _LANE)

    blk_bytes = (3 + l2) * tm * _LANE * itemsize
    compiler_params = pltpu.CompilerParams(
        dimension_semantics=("parallel",),
        vmem_limit_bytes=int(max(2 * blk_bytes + (4 << 20), 32 << 20)),
    )
    cost = pl.CostEstimate(
        flops=int(n_pad * (3 * l2 + 8)),
        transcendentals=0,
        bytes_accessed=int(n_pad * (3 + l2) * itemsize),
    )

    out_t = pl.pallas_call(
        _make_sh_kernel(levels, tm, chunk),
        out_shape=jax.ShapeDtypeStruct((l2, n_rows_pad, _LANE), out_dtype),
        grid=(n_blocks,),
        in_specs=[pl.BlockSpec((3, tm, _LANE), lambda i: (0, i, 0))],
        out_specs=pl.BlockSpec((l2, tm, _LANE), lambda i: (0, i, 0)),
        compiler_params=compiler_params,
        cost_estimate=cost,
    )(dirs_t)

    # TODO(synk): this (l2, N) -> (N, l2) relayout is the remaining extra HBM pass;
    # removing it needs a channels-first consumer or fusing the first l2->hidden linear
    # into this kernel (outside this module).  Slice before transposing so padded tail
    # rows are never relaid out.
    out = out_t.reshape(l2, n_pad)[:, :n].T
    return out.reshape(*batch_shape, l2)


def _reference_sh(x, levels):
    # Pure-JAX reference of components_from_spherical_harmonics for checking.
    d = x[..., :3].astype(jnp.float32)
    xx_, yy_, zz_ = d[..., 0] ** 2, d[..., 1] ** 2, d[..., 2] ** 2
    xc, yc, zc = d[..., 0], d[..., 1], d[..., 2]
    comps = [jnp.full_like(xc, 0.28209479177387814)]
    if levels > 1:
        comps += [0.4886025119029199 * yc, 0.4886025119029199 * zc, 0.4886025119029199 * xc]
    if levels > 2:
        comps += [1.0925484305920792 * xc * yc,
                  1.0925484305920792 * yc * zc,
                  0.9461746957575601 * zz_ - 0.31539156525251999,
                  1.0925484305920792 * xc * zc,
                  0.5462742152960396 * (xx_ - yy_)]
    if levels > 3:
        comps += [0.5900435899266435 * yc * (3 * xx_ - yy_),
                  2.890611442640554 * xc * yc * zc,
                  0.4570457994644658 * yc * (5 * zz_ - 1),
                  0.3731763325901154 * zc * (5 * zz_ - 3),
                  0.4570457994644658 * xc * (5 * zz_ - 1),
                  1.445305721320277 * zc * (xx_ - yy_),
                  0.5900435899266435 * xc * (xx_ - 3 * yy_)]
    if levels > 4:
        comps += [2.5033429417967046 * xc * yc * (xx_ - yy_),
                  1.7701307697799304 * yc * zc * (3 * xx_ - yy_),
                  0.9461746957575601 * xc * yc * (7 * zz_ - 1),
                  0.6690465435572892 * yc * zc * (7 * zz_ - 3),
                  0.10578554691520431 * (35 * zz_ * zz_ - 30 * zz_ + 3),
                  0.6690465435572892 * xc * zc * (7 * zz_ - 3),
                  0.47308734787878004 * (xx_ - yy_) * (7 * zz_ - 1),
                  1.7701307697799304 * xc * zc * (xx_ - 3 * yy_),
                  0.6258357354491761 * (xx_ * (xx_ - 3 * yy_) - yy_ * (3 * xx_ - yy_))]
    return jnp.stack(comps, axis=-1)


if __name__ == "__main__":
    key = jax.random.PRNGKey(0)
    k1, k2, k3 = jax.random.split(key, 3)
    omega = 30.0  # unused by the reference forward (kept for signature parity)

    # Small case: levels=4 -> hidden_features = 16.
    levels = 4
    x = jax.random.normal(k1, (2, 256, 3), dtype=jnp.float32)
    x = x / jnp.linalg.norm(x, axis=-1, keepdims=True)
    out = jax.block_until_ready(spherical_harmonics_layer(x, levels, omega))
    ref = _reference_sh(x, levels)
    assert out.shape == (2, 256, levels ** 2), out.shape
    assert jnp.allclose(out, ref, atol=1e-5, rtol=1e-5), float(jnp.max(jnp.abs(out - ref)))

    # Larger case exercising the multi-block grid + chunked inner loop: levels=5 -> 25.
    levels5 = 5
    x2 = jax.random.normal(k2, (4, 16500, 3), dtype=jnp.float32)
    x2 = x2 / jnp.linalg.norm(x2, axis=-1, keepdims=True)
    out2 = jax.block_until_ready(spherical_harmonics_layer(x2, levels5, omega))
    ref2 = _reference_sh(x2, levels5)
    assert out2.shape == (4, 16500, levels5 ** 2), out2.shape
    assert jnp.allclose(out2, ref2, atol=1e-5, rtol=1e-5), float(jnp.max(jnp.abs(out2 - ref2)))

    # bf16 case: input stays bf16 end-to-end, kernel upcasts in-register.
    levels3 = 3
    x3 = jax.random.normal(k3, (1, 1000, 3), dtype=jnp.bfloat16)
    x3 = x3 / jnp.linalg.norm(x3.astype(jnp.float32), axis=-1, keepdims=True).astype(jnp.bfloat16)
    out3 = jax.block_until_ready(spherical_harmonics_layer(x3, levels3, omega))
    ref3 = _reference_sh(x3, levels3)
    assert out3.shape == (1, 1000, levels3 ** 2), out3.shape
    assert out3.dtype == jnp.bfloat16
    assert jnp.allclose(out3.astype(jnp.float32), ref3, atol=3e-2), \
        float(jnp.max(jnp.abs(out3.astype(jnp.float32) - ref3)))

    print("KERNEL_OK")
</pallas_src>

<mosaic_0001>
module attributes {stable_mosaic.version = 11 : i64} {
  func.func @kernel(%arg0: i32, %arg1: memref<3x8x128xf32, #tpu.memory_space<vmem>>, %arg2: memref<16x8x128xf32, #tpu.memory_space<vmem>>) attributes {dimension_semantics = [#tpu.dimension_semantics<parallel>], iteration_bounds = array<i64: 1>, scalar_prefetch = 0 : i64, scratch_operands = 0 : i64, tpu.core_type = #tpu.core_type<tc>, window_params = [{transform_indices = @transform_0, window_bounds = array<i64: 3, 8, 128>}, {transform_indices = @transform_1, window_bounds = array<i64: 16, 8, 128>}]} {
    %cst = arith.constant 0.282094806 : f32
    %0 = vector.broadcast %cst : f32 to vector<8x128xf32>
    %c0_i32 = arith.constant 0 : i32
    %c8_i32 = arith.constant 8 : i32
    %1 = arith.muli %c0_i32, %c8_i32 : i32
    %2 = tpu.assume_multiple %1, 8 : i32
    %c0 = arith.constant 0 : index
    %3 = arith.index_cast %2 : i32 to index
    %c0_0 = arith.constant 0 : index
    %4 = vector.load %arg2[%c0, %3, %c0_0] : memref<16x8x128xf32, #tpu.memory_space<vmem>>, vector<1x8x128xf32>
    %5 = vector.shape_cast %4 : vector<1x8x128xf32> to vector<8x128xf32>
    %6 = vector.shape_cast %0 : vector<8x128xf32> to vector<1x8x128xf32>
    tpu.vector_store %arg2[%c0, %3, %c0_0], %6 {strides = array<i32>} : memref<16x8x128xf32, #tpu.memory_space<vmem>>, vector<1x8x128xf32>,
    %c0_1 = arith.constant 0 : index
    %7 = arith.index_cast %2 : i32 to index
    %c0_2 = arith.constant 0 : index
    %8 = vector.load %arg1[%c0_1, %7, %c0_2] : memref<3x8x128xf32, #tpu.memory_space<vmem>>, vector<1x8x128xf32>
    %9 = vector.shape_cast %8 : vector<1x8x128xf32> to vector<8x128xf32>
    %c1 = arith.constant 1 : index
    %10 = arith.index_cast %2 : i32 to index
    %c0_3 = arith.constant 0 : index
    %11 = vector.load %arg1[%c1, %10, %c0_3] : memref<3x8x128xf32, #tpu.memory_space<vmem>>, vector<1x8x128xf32>
    %12 = vector.shape_cast %11 : vector<1x8x128xf32> to vector<8x128xf32>
    %c2 = arith.constant 2 : index
    %13 = arith.index_cast %2 : i32 to index
    %c0_4 = arith.constant 0 : index
    %14 = vector.load %arg1[%c2, %13, %c0_4] : memref<3x8x128xf32, #tpu.memory_space<vmem>>, vector<1x8x128xf32>
    %15 = vector.shape_cast %14 : vector<1x8x128xf32> to vector<8x128xf32>
    %cst_5 = arith.constant 0.488602519 : f32
    %16 = vector.broadcast %cst_5 : f32 to vector<8x128xf32>
    %17 = arith.mulf %16, %12 : vector<8x128xf32>
    %c1_6 = arith.constant 1 : index
    %18 = arith.index_cast %2 : i32 to index
    %c0_7 = arith.constant 0 : index
    %19 = vector.load %arg2[%c1_6, %18, %c0_7] : memref<16x8x128xf32, #tpu.memory_space<vmem>>, vector<1x8x128xf32>
    %20 = vector.shape_cast %19 : vector<1x8x128xf32> to vector<8x128xf32>
    %21 = vector.shape_cast %17 : vector<8x128xf32> to vector<1x8x128xf32>
    tpu.vector_store %arg2[%c1_6, %18, %c0_7], %21 {strides = array<i32>} : memref<16x8x128xf32, #tpu.memory_space<vmem>>, vector<1x8x128xf32>,
    %cst_8 = arith.constant 0.488602519 : f32
    %22 = vector.broadcast %cst_8 : f32 to vector<8x128xf32>
    %23 = arith.mulf %22, %15 : vector<8x128xf32>
    %c2_9 = arith.constant 2 : index
    %24 = arith.index_cast %2 : i32 to index
    %c0_10 = arith.constant 0 : index
    %25 = vector.load %arg2[%c2_9, %24, %c0_10] : memref<16x8x128xf32, #tpu.memory_space<vmem>>, vector<1x8x128xf32>
    %26 = vector.shape_cast %25 : vector<1x8x128xf32> to vector<8x128xf32>
    %27 = vector.shape_cast %23 : vector<8x128xf32> to vector<1x8x128xf32>
    tpu.vector_store %arg2[%c2_9, %24, %c0_10], %27 {strides = array<i32>} : memref<16x8x128xf32, #tpu.memory_space<vmem>>, vector<1x8x128xf32>,
    %cst_11 = arith.constant 0.488602519 : f32
    %28 = vector.broadcast %cst_11 : f32 to vector<8x128xf32>
    %29 = arith.mulf %28, %9 : vector<8x128xf32>
    %c3 = arith.constant 3 : index
    %30 = arith.index_cast %2 : i32 to index
    %c0_12 = arith.constant 0 : index
    %31 = vector.load %arg2[%c3, %30, %c0_12] : memref<16x8x128xf32, #tpu.memory_space<vmem>>, vector<1x8x128xf32>
    %32 = vector.shape_cast %31 : vector<1x8x128xf32> to vector<8x128xf32>
    %33 = vector.shape_cast %29 : vector<8x128xf32> to vector<1x8x128xf32>
    tpu.vector_store %arg2[%c3, %30, %c0_12], %33 {strides = array<i32>} : memref<16x8x128xf32, #tpu.memory_space<vmem>>, vector<1x8x128xf32>,
    %34 = arith.mulf %9, %9 : vector<8x128xf32>
    %35 = arith.mulf %12, %12 : vector<8x128xf32>
    %36 = arith.mulf %15, %15 : vector<8x128xf32>
    %37 = arith.mulf %9, %12 : vector<8x128xf32>
    %38 = arith.mulf %12, %15 : vector<8x128xf32>
    %39 = arith.mulf %9, %15 : vector<8x128xf32>
    %40 = arith.subf %34, %35 : vector<8x128xf32>
    %cst_13 = arith.constant 1.09254849 : f32
    %41 = vector.broadcast %cst_13 : f32 to vector<8x128xf32>
    %42 = arith.mulf %41, %37 : vector<8x128xf32>
    %c4 = arith.constant 4 : index
    %43 = arith.index_cast %2 : i32 to index
    %c0_14 = arith.constant 0 : index
    %44 = vector.load %arg2[%c4, %43, %c0_14] : memref<16x8x128xf32, #tpu.memory_space<vmem>>, vector<1x8x128xf32>
    %45 = vector.shape_cast %44 : vector<1x8x128xf32> to vector<8x128xf32>
    %46 = vector.shape_cast %42 : vector<8x128xf32> to vector<1x8x128xf32>
    tpu.vector_store %arg2[%c4, %43, %c0_14], %46 {strides = array<i32>} : memref<16x8x128xf32, #tpu.memory_space<vmem>>, vector<1x8x128xf32>,
    %cst_15 = arith.constant 1.09254849 : f32
    %47 = vector.broadcast %cst_15 : f32 to vector<8x128xf32>
    %48 = arith.mulf %47, %38 : vector<8x128xf32>
    %c5 = arith.constant 5 : index
    %49 = arith.index_cast %2 : i32 to index
    %c0_16 = arith.constant 0 : index
    %50 = vector.load %arg2[%c5, %49, %c0_16] : memref<16x8x128xf32, #tpu.memory_space<vmem>>, vector<1x8x128xf32>
    %51 = vector.shape_cast %50 : vector<1x8x128xf32> to vector<8x128xf32>
    %52 = vector.shape_cast %48 : vector<8x128xf32> to vector<1x8x128xf32>
    tpu.vector_store %arg2[%c5, %49, %c0_16], %52 {strides = array<i32>} : memref<16x8x128xf32, #tpu.memory_space<vmem>>, vector<1x8x128xf32>,
    %cst_17 = arith.constant 0.946174681 : f32
    %53 = vector.broadcast %cst_17 : f32 to vector<8x128xf32>
    %54 = arith.mulf %53, %36 : vector<8x128xf32>
    %cst_18 = arith.constant 0.31539157 : f32
    %55 = vector.broadcast %cst_18 : f32 to vector<8x128xf32>
    %56 = arith.subf %54, %55 : vector<8x128xf32>
    %c6 = arith.constant 6 : index
    %57 = arith.index_cast %2 : i32 to index
    %c0_19 = arith.constant 0 : index
    %58 = vector.load %arg2[%c6, %57, %c0_19] : memref<16x8x128xf32, #tpu.memory_space<vmem>>, vector<1x8x128xf32>
    %59 = vector.shape_cast %58 : vector<1x8x128xf32> to vector<8x128xf32>
    %60 = vector.shape_cast %56 : vector<8x128xf32> to vector<1x8x128xf32>
    tpu.vector_store %arg2[%c6, %57, %c0_19], %60 {strides = array<i32>} : memref<16x8x128xf32, #tpu.memory_space<vmem>>, vector<1x8x128xf32>,
    %cst_20 = arith.constant 1.09254849 : f32
    %61 = vector.broadcast %cst_20 : f32 to vector<8x128xf32>
    %62 = arith.mulf %61, %39 : vector<8x128xf32>
    %c7 = arith.constant 7 : index
    %63 = arith.index_cast %2 : i32 to index
    %c0_21 = arith.constant 0 : index
    %64 = vector.load %arg2[%c7, %63, %c0_21] : memref<16x8x128xf32, #tpu.memory_space<vmem>>, vector<1x8x128xf32>
    %65 = vector.shape_cast %64 : vector<1x8x128xf32> to vector<8x128xf32>
    %66 = vector.shape_cast %62 : vector<8x128xf32> to vector<1x8x128xf32>
    tpu.vector_store %arg2[%c7, %63, %c0_21], %66 {strides = array<i32>} : memref<16x8x128xf32, #tpu.memory_space<vmem>>, vector<1x8x128xf32>,
    %cst_22 = arith.constant 0.546274245 : f32
    %67 = vector.broadcast %cst_22 : f32 to vector<8x128xf32>
    %68 = arith.mulf %67, %40 : vector<8x128xf32>
    %c8 = arith.constant 8 : index
    %69 = arith.index_cast %2 : i32 to index
    %c0_23 = arith.constant 0 : index
    %70 = vector.load %arg2[%c8, %69, %c0_23] : memref<16x8x128xf32, #tpu.memory_space<vmem>>, vector<1x8x128xf32>
    %71 = vector.shape_cast %70 : vector<1x8x128xf32> to vector<8x128xf32>
    %72 = vector.shape_cast %68 : vector<8x128xf32> to vector<1x8x128xf32>
    tpu.vector_store %arg2[%c8, %69, %c0_23], %72 {strides = array<i32>} : memref<16x8x128xf32, #tpu.memory_space<vmem>>, vector<1x8x128xf32>,
    %cst_24 = arith.constant 3.000000e+00 : f32
    %73 = vector.broadcast %cst_24 : f32 to vector<8x128xf32>
    %74 = arith.mulf %73, %34 : vector<8x128xf32>
    %75 = arith.subf %74, %35 : vector<8x128xf32>
    %cst_25 = arith.constant 3.000000e+00 : f32
    %76 = vector.broadcast %cst_25 : f32 to vector<8x128xf32>
    %77 = arith.mulf %76, %35 : vector<8x128xf32>
    %78 = arith.subf %34, %77 : vector<8x128xf32>
    %cst_26 = arith.constant 5.000000e+00 : f32
    %79 = vector.broadcast %cst_26 : f32 to vector<8x128xf32>
    %80 = arith.mulf %79, %36 : vector<8x128xf32>
    %cst_27 = arith.constant 1.000000e+00 : f32
    %81 = vector.broadcast %cst_27 : f32 to vector<8x128xf32>
    %82 = arith.subf %80, %81 : vector<8x128xf32>
    %cst_28 = arith.constant 0.590043604 : f32
    %83 = vector.broadcast %cst_28 : f32 to vector<8x128xf32>
    %84 = arith.mulf %83, %12 : vector<8x128xf32>
    %85 = arith.mulf %84, %75 : vector<8x128xf32>
    %c9 = arith.constant 9 : index
    %86 = arith.index_cast %2 : i32 to index
    %c0_29 = arith.constant 0 : index
    %87 = vector.load %arg2[%c9, %86, %c0_29] : memref<16x8x128xf32, #tpu.memory_space<vmem>>, vector<1x8x128xf32>
    %88 = vector.shape_cast %87 : vector<1x8x128xf32> to vector<8x128xf32>
    %89 = vector.shape_cast %85 : vector<8x128xf32> to vector<1x8x128xf32>
    tpu.vector_store %arg2[%c9, %86, %c0_29], %89 {strides = array<i32>} : memref<16x8x128xf32, #tpu.memory_space<vmem>>, vector<1x8x128xf32>,
    %cst_30 = arith.constant 2.89061141 : f32
    %90 = vector.broadcast %cst_30 : f32 to vector<8x128xf32>
    %91 = arith.mulf %90, %37 : vector<8x128xf32>
    %92 = arith.mulf %91, %15 : vector<8x128xf32>
    %c10 = arith.constant 10 : index
    %93 = arith.index_cast %2 : i32 to index
    %c0_31 = arith.constant 0 : index
    %94 = vector.load %arg2[%c10, %93, %c0_31] : memref<16x8x128xf32, #tpu.memory_space<vmem>>, vector<1x8x128xf32>
    %95 = vector.shape_cast %94 : vector<1x8x128xf32> to vector<8x128xf32>
    %96 = vector.shape_cast %92 : vector<8x128xf32> to vector<1x8x128xf32>
    tpu.vector_store %arg2[%c10, %93, %c0_31], %96 {strides = array<i32>} : memref<16x8x128xf32, #tpu.memory_space<vmem>>, vector<1x8x128xf32>,
    %cst_32 = arith.constant 0.457045794 : f32
    %97 = vector.broadcast %cst_32 : f32 to vector<8x128xf32>
    %98 = arith.mulf %97, %12 : vector<8x128xf32>
    %99 = arith.mulf %98, %82 : vector<8x128xf32>
    %c11 = arith.constant 11 : index
    %100 = arith.index_cast %2 : i32 to index
    %c0_33 = arith.constant 0 : index
    %101 = vector.load %arg2[%c11, %100, %c0_33] : memref<16x8x128xf32, #tpu.memory_space<vmem>>, vector<1x8x128xf32>
    %102 = vector.shape_cast %101 : vector<1x8x128xf32> to vector<8x128xf32>
    %103 = vector.shape_cast %99 : vector<8x128xf32> to vector<1x8x128xf32>
    tpu.vector_store %arg2[%c11, %100, %c0_33], %103 {strides = array<i32>} : memref<16x8x128xf32, #tpu.memory_space<vmem>>, vector<1x8x128xf32>,
    %cst_34 = arith.constant 0.373176336 : f32
    %104 = vector.broadcast %cst_34 : f32 to vector<8x128xf32>
    %105 = arith.mulf %104, %15 : vector<8x128xf32>
    %cst_35 = arith.constant 5.000000e+00 : f32
    %106 = vector.broadcast %cst_35 : f32 to vector<8x128xf32>
    %107 = arith.mulf %106, %36 : vector<8x128xf32>
    %cst_36 = arith.constant 3.000000e+00 : f32
    %108 = vector.broadcast %cst_36 : f32 to vector<8x128xf32>
    %109 = arith.subf %107, %108 : vector<8x128xf32>
    %110 = arith.mulf %105, %109 : vector<8x128xf32>
    %c12 = arith.constant 12 : index
    %111 = arith.index_cast %2 : i32 to index
    %c0_37 = arith.constant 0 : index
    %112 = vector.load %arg2[%c12, %111, %c0_37] : memref<16x8x128xf32, #tpu.memory_space<vmem>>, vector<1x8x128xf32>
    %113 = vector.shape_cast %112 : vector<1x8x128xf32> to vector<8x128xf32>
    %114 = vector.shape_cast %110 : vector<8x128xf32> to vector<1x8x128xf32>
    tpu.vector_store %arg2[%c12, %111, %c0_37], %114 {strides = array<i32>} : memref<16x8x128xf32, #tpu.memory_space<vmem>>, vector<1x8x128xf32>,
    %cst_38 = arith.constant 0.457045794 : f32
    %115 = vector.broadcast %cst_38 : f32 to vector<8x128xf32>
    %116 = arith.mulf %115, %9 : vector<8x128xf32>
    %117 = arith.mulf %116, %82 : vector<8x128xf32>
    %c13 = arith.constant 13 : index
    %118 = arith.index_cast %2 : i32 to index
    %c0_39 = arith.constant 0 : index
    %119 = vector.load %arg2[%c13, %118, %c0_39] : memref<16x8x128xf32, #tpu.memory_space<vmem>>, vector<1x8x128xf32>
    %120 = vector.shape_cast %119 : vector<1x8x128xf32> to vector<8x128xf32>
    %121 = vector.shape_cast %117 : vector<8x128xf32> to vector<1x8x128xf32>
    tpu.vector_store %arg2[%c13, %118, %c0_39], %121 {strides = array<i32>} : memref<16x8x128xf32, #tpu.memory_space<vmem>>, vector<1x8x128xf32>,
    %cst_40 = arith.constant 1.44530571 : f32
    %122 = vector.broadcast %cst_40 : f32 to vector<8x128xf32>
    %123 = arith.mulf %122, %15 : vector<8x128xf32>
    %124 = arith.mulf %123, %40 : vector<8x128xf32>
    %c14 = arith.constant 14 : index
    %125 = arith.index_cast %2 : i32 to index
    %c0_41 = arith.constant 0 : index
    %126 = vector.load %arg2[%c14, %125, %c0_41] : memref<16x8x128xf32, #tpu.memory_space<vmem>>, vector<1x8x128xf32>
    %127 = vector.shape_cast %126 : vector<1x8x128xf32> to vector<8x128xf32>
    %128 = vector.shape_cast %124 : vector<8x128xf32> to vector<1x8x128xf32>
    tpu.vector_store %arg2[%c14, %125, %c0_41], %128 {strides = array<i32>} : memref<16x8x128xf32, #tpu.memory_space<vmem>>, vector<1x8x128xf32>,
    %cst_42 = arith.constant 0.590043604 : f32
    %129 = vector.broadcast %cst_42 : f32 to vector<8x128xf32>
    %130 = arith.mulf %129, %9 : vector<8x128xf32>
    %131 = arith.mulf %130, %78 : vector<8x128xf32>
    %c15 = arith.constant 15 : index
    %132 = arith.index_cast %2 : i32 to index
    %c0_43 = arith.constant 0 : index
    %133 = vector.load %arg2[%c15, %132, %c0_43] : memref<16x8x128xf32, #tpu.memory_space<vmem>>, vector<1x8x128xf32>
    %134 = vector.shape_cast %133 : vector<1x8x128xf32> to vector<8x128xf32>
    %135 = vector.shape_cast %131 : vector<8x128xf32> to vector<1x8x128xf32>
    tpu.vector_store %arg2[%c15, %132, %c0_43], %135 {strides = array<i32>} : memref<16x8x128xf32, #tpu.memory_space<vmem>>, vector<1x8x128xf32>,
    %c1_i32 = arith.constant 1 : i32
    return
  }
  func.func @transform_0(%arg0: i32) -> (i32, i32, i32) {
    %c0_i32 = arith.constant 0 : i32
    %c0_i32_0 = arith.constant 0 : i32
    %c0_i32_1 = arith.constant 0 : i32
    return %c0_i32, %arg0, %c0_i32_0 : i32, i32, i32
  }
  func.func @transform_1(%arg0: i32) -> (i32, i32, i32) {
    %c0_i32 = arith.constant 0 : i32
    %c0_i32_0 = arith.constant 0 : i32
    %c0_i32_1 = arith.constant 0 : i32
    return %c0_i32, %arg0, %c0_i32_0 : i32, i32, i32
  }
}

</mosaic_0001>

<llo_original>
// kernel: spherical_harmonics_layer.1
$region0: #{spherical_harmonics_layer.1}
  #allocation0 [shape = 'u32[]', space=smem, size = 0x4, offset = 0x4, fixed_abs, tag = 'smem constant byte address 0x4 - core index']
  #allocation1 [shape = 'u32[144,128]{1,0:T(1,128)}', space=vmem, size = 0x12000, scoped, tag = 'internal scratch']
  %s0 = inlined_call_operand.vmem [shape: f32[3,8,128], index: 0, kind: input, shape index: {}]
  %s1 = inlined_call_operand.vmem [shape: f32[16,8,128], index: 1, kind: output, shape index: {}]
  %s2 = sld [smem:[#allocation0]]
  $region14: #{spherical_harmonics_layer.1} parent=0
    _
  %s4 = ssub.s32 1, %s2
  %s5 = scalar_select 0, %s4, %s2
  // Predicated region
  $region2: #{spherical_harmonics_layer.1} parent=0 // pred_check
    _
  $region3: #{spherical_harmonics_layer.1} parent=0 // pred_check_branch
    %7 = sbr.rel (0) target = $region5
  $region4: #{spherical_harmonics_layer.1} parent=0 // pred_region
    _
  $region5: #{spherical_harmonics_layer.1} parent=0 // pred_fallthru
    _
  %8 = vst [vmem:[%s1] sm:$0xff] 0.2820948
  %v9 = vld [vmem:[%s0] sm:$0xff]
  %s10 = sadd.s32 0, 8
  %s11 = scalar_lea.vmem %s0, %s10
  %v12 = vld [vmem:[%s11] sm:$0xff]
  %s13 = sadd.s32 0, 16
  %s14 = scalar_lea.vmem %s0, %s13
  %v15 = vld [vmem:[%s14] sm:$0xff]
  %v16 = vmul.f32 %v12, 0.48860252
  %s17 = scalar_lea.vmem %s1, %s10
  %18 = vst [vmem:[%s17] sm:$0xff] %v16
  %v19 = vmul.f32 %v15, 0.48860252
  %s20 = scalar_lea.vmem %s1, %s13
  %21 = vst [vmem:[%s20] sm:$0xff] %v19
  %v22 = vmul.f32 %v9, 0.48860252
  %s23 = sadd.s32 0, 24
  %s24 = scalar_lea.vmem %s1, %s23
  %25 = vst [vmem:[%s24] sm:$0xff] %v22
  %v26 = vmul.f32 %v9, %v9
  %v27 = vmul.f32 %v12, %v12
  %v28 = vmul.f32 %v15, %v15
  %v29 = vmul.f32 %v9, %v12
  %v30 = vmul.f32 %v12, %v15
  %v31 = vmul.f32 %v9, %v15
  %v32 = vsub.f32 %v26, %v27
  %v33 = vmul.f32 %v29, 1.0925485
  %s34 = sadd.s32 0, 32
  %s35 = scalar_lea.vmem %s1, %s34
  %36 = vst [vmem:[%s35] sm:$0xff] %v33
  %v37 = vmul.f32 %v30, 1.0925485
  %s38 = sadd.s32 0, 40
  %s39 = scalar_lea.vmem %s1, %s38
  %40 = vst [vmem:[%s39] sm:$0xff] %v37
  %v41 = vmul.f32 %v28, 0.9461747
  %v42 = vsub.f32 %v41, 0.31539157
  %s43 = sadd.s32 0, 48
  %s44 = scalar_lea.vmem %s1, %s43
  %45 = vst [vmem:[%s44] sm:$0xff] %v42
  %v46 = vmul.f32 %v31, 1.0925485
  %s47 = sadd.s32 0, 56
  %s48 = scalar_lea.vmem %s1, %s47
  %49 = vst [vmem:[%s48] sm:$0xff] %v46
  %v50 = vmul.f32 %v32, 0.54627424
  %s51 = sadd.s32 0, 64
  %s52 = scalar_lea.vmem %s1, %s51
  %53 = vst [vmem:[%s52] sm:$0xff] %v50
  %v54 = vmul.f32 %v26, 3.0
  %v55 = vsub.f32 %v54, %v27
  %v56 = vmul.f32 %v27, 3.0
  %v57 = vsub.f32 %v26, %v56
  %v58 = vmul.f32 %v28, 5.0
  %v59 = vsub.f32 %v58, 1.0
  %v60 = vmul.f32 %v12, 0.5900436
  %v61 = vmul.f32 %v60, %v55
  %s62 = sadd.s32 0, 72
  %s63 = scalar_lea.vmem %s1, %s62
  %64 = vst [vmem:[%s63] sm:$0xff] %v61
  %v65 = vmul.f32 %v29, 2.8906114
  %v66 = vmul.f32 %v65, %v15
  %s67 = sadd.s32 0, 80
  %s68 = scalar_lea.vmem %s1, %s67
  %69 = vst [vmem:[%s68] sm:$0xff] %v66
  %v70 = vmul.f32 %v12, 0.4570458
  %v71 = vmul.f32 %v70, %v59
  %s72 = sadd.s32 0, 88
  %s73 = scalar_lea.vmem %s1, %s72
  %74 = vst [vmem:[%s73] sm:$0xff] %v71
  %v75 = vmul.f32 %v15, 0.37317634
  %v76 = vsub.f32 %v58, 3.0
  %v77 = vmul.f32 %v75, %v76
  %s78 = sadd.s32 0, 96
  %s79 = scalar_lea.vmem %s1, %s78
  %80 = vst [vmem:[%s79] sm:$0xff] %v77
  %v81 = vmul.f32 %v9, 0.4570458
  %v82 = vmul.f32 %v81, %v59
  %s83 = sadd.s32 0, 104
  %s84 = scalar_lea.vmem %s1, %s83
  %85 = vst [vmem:[%s84] sm:$0xff] %v82
  %v86 = vmul.f32 %v15, 1.4453057
  %v87 = vmul.f32 %v86, %v32
  %s88 = sadd.s32 0, 112
  %s89 = scalar_lea.vmem %s1, %s88
  %90 = vst [vmem:[%s89] sm:$0xff] %v87
  %v91 = vmul.f32 %v9, 0.5900436
  %v92 = vmul.f32 %v91, %v57
  %s93 = sadd.s32 0, 120
  %s94 = scalar_lea.vmem %s1, %s93
  %95 = vst [vmem:[%s94] sm:$0xff] %v92
  // Predicated region
  $region6: #{spherical_harmonics_layer.1} parent=0 // pred_check
    _
  $region7: #{spherical_harmonics_layer.1} parent=0 // pred_check_branch
    %97 = sbr.rel (0) target = $region9
  $region8: #{spherical_harmonics_layer.1} parent=0 // pred_region
    _
  $region9: #{spherical_harmonics_layer.1} parent=0 // pred_fallthru
    _
  // Predicated region
  $region10: #{spherical_harmonics_layer.1} parent=0 // pred_check
    _
  $region11: #{spherical_harmonics_layer.1} parent=0 // pred_check_branch
    %99 = sbr.rel (0) target = $region13
  $region12: #{spherical_harmonics_layer.1} parent=0 // pred_region
    _
  $region13: #{spherical_harmonics_layer.1} parent=0 // pred_fallthru
    _

</llo_original>
